<compile_context>
chip_gen: v7x
topology: tpu7x:2x2x1
jax: 0.10.0
libtpu: 0.0.40
codegen_flags: <defaults>
</compile_context>

<pallas_src>
import numpy as np
import jax
import jax.numpy as jnp
from jax.experimental import pallas as pl
from jax.experimental.pallas import tpu as pltpu


# ------------------------------ Pallas kernel -------------------------------
def _tfatt_kernel(x_ref, w1_ref, b1_ref, w2t_ref, b2_ref, o_ref):
    # x_ref: (1, C, H, W) block for one batch element.
    c = x_ref.shape[1]

    # avg_pool2d over the channel axis -> (H, W)
    y = x_ref[0, 0]
    for ci in range(1, c):
        y = y + x_ref[0, ci]
    y = y * (1.0 / c)

    # Linear over H (BN1 folded): z1[h', w] = sum_h W1f[h', h] * y[h, w] + b1f[h']
    z1 = jnp.dot(w1_ref[...], y, preferred_element_type=jnp.float32) + b1_ref[...]
    z1 = jax.nn.sigmoid(z1)

    # Linear over W (BN2 folded): z2[h, w'] = sum_w z1[h, w] * W2f[w', w] + b2f[w']
    z2 = jnp.dot(z1, w2t_ref[...], preferred_element_type=jnp.float32) + b2_ref[...]
    o_ref[0, 0] = jax.nn.sigmoid(z2)


# -------------------------------- wrapper -----------------------------------
def tfattention_forward(x, params, eps=1e-5):
    """Eval-mode TFattention forward. x: (N, C, H, W) f32 -> (N, 1, H, W)."""
    N, C, H, W = x.shape

    # Fold BatchNorm2d(1) (eval running stats; scalar affine) into the Linears.
    s1 = params["bn1_gamma"] / jnp.sqrt(params["bn1_var"] + eps)
    w1f = (s1 * params["w1"]).astype(jnp.float32)                          # (H, H)
    b1f = (s1 * params["b1"] + (params["bn1_beta"] - s1 * params["bn1_mean"]))
    b1f = b1f.reshape(H, 1).astype(jnp.float32)                            # (H, 1)

    s2 = params["bn2_gamma"] / jnp.sqrt(params["bn2_var"] + eps)
    w2t = jnp.transpose(s2 * params["w2"]).astype(jnp.float32)             # (W, W) pre-transposed
    b2f = (s2 * params["b2"] + (params["bn2_beta"] - s2 * params["bn2_mean"]))
    b2f = b2f.reshape(1, W).astype(jnp.float32)                            # (1, W)

    return pl.pallas_call(
        _tfatt_kernel,
        out_shape=jax.ShapeDtypeStruct((N, 1, H, W), jnp.float32),
        grid=(N,),
        in_specs=[
            pl.BlockSpec((1, C, H, W), lambda n: (n, 0, 0, 0)),
            pl.BlockSpec((H, H), lambda n: (0, 0)),
            pl.BlockSpec((H, 1), lambda n: (0, 0)),
            pl.BlockSpec((W, W), lambda n: (0, 0)),
            pl.BlockSpec((1, W), lambda n: (0, 0)),
        ],
        out_specs=pl.BlockSpec((1, 1, H, W), lambda n: (n, 0, 0, 0)),
        compiler_params=pltpu.CompilerParams(dimension_semantics=("parallel",)),
    )(x.astype(jnp.float32), w1f, b1f, w2t, b2f)


# ----------------------------- numpy reference ------------------------------
def _ref_forward(x, params, eps=1e-5):
    f = lambda k: np.asarray(params[k], np.float64)
    x = np.asarray(x, np.float64)

    # avg_pool2d((N,H,C,W), (C,1)) == mean over channel dim
    y = x.mean(axis=1, keepdims=True)                                      # (N,1,H,W)

    # linear1 (over H) + BN1 + sigmoid
    t = np.transpose(y, (0, 1, 3, 2))                                      # (N,1,W,H)
    t = t @ f("w1").T + f("b1")
    t = (t - f("bn1_mean")) / np.sqrt(f("bn1_var") + eps) * f("bn1_gamma") + f("bn1_beta")
    t = 1.0 / (1.0 + np.exp(-t))
    z1 = np.transpose(t, (0, 1, 3, 2))                                     # (N,1,H,W)

    # linear2 (over W) + BN2 + sigmoid
    t = z1 @ f("w2").T + f("b2")
    t = (t - f("bn2_mean")) / np.sqrt(f("bn2_var") + eps) * f("bn2_gamma") + f("bn2_beta")
    return 1.0 / (1.0 + np.exp(-t))


# ----------------------------------- main ------------------------------------
if __name__ == "__main__":
    N, C, H, W = 2, 4, 16, 16            # insize = (H, W) = (16, 16)

    key = jax.random.PRNGKey(0)
    ks = jax.random.split(key, 6)

    params = {
        # PyTorch nn.Linear weight layout: (out_features, in_features)
        "w1": 0.3 * jax.random.normal(ks[0], (H, H), jnp.float32),
        "b1": 0.1 * jax.random.normal(ks[1], (H,), jnp.float32),
        "bn1_gamma": jnp.asarray([1.2], jnp.float32),
        "bn1_beta":  jnp.asarray([-0.1], jnp.float32),
        "bn1_mean":  jnp.asarray([0.05], jnp.float32),
        "bn1_var":   jnp.asarray([0.9], jnp.float32),
        "w2": 0.3 * jax.random.normal(ks[2], (W, W), jnp.float32),
        "b2": 0.1 * jax.random.normal(ks[3], (W,), jnp.float32),
        "bn2_gamma": jnp.asarray([0.8], jnp.float32),
        "bn2_beta":  jnp.asarray([0.2], jnp.float32),
        "bn2_mean":  jnp.asarray([-0.03], jnp.float32),
        "bn2_var":   jnp.asarray([1.1], jnp.float32),
    }

    x = jax.random.normal(ks[4], (N, C, H, W), jnp.float32)

    out = jax.block_until_ready(tfattention_forward(x, params))
    assert out.shape == (N, 1, H, W), out.shape

    ref = _ref_forward(x, params)
    np.testing.assert_allclose(np.asarray(out), ref, rtol=2e-3, atol=2e-3)

    print("KERNEL_OK")
</pallas_src>

<mosaic_0001>
module attributes {stable_mosaic.version = 11 : i64} {
  func.func @_tfatt_kernel(%arg0: i32, %arg1: memref<1x4x16x16xf32, #tpu.memory_space<vmem>>, %arg2: memref<16x16xf32, #tpu.memory_space<vmem>>, %arg3: memref<16x1xf32, #tpu.memory_space<vmem>>, %arg4: memref<16x16xf32, #tpu.memory_space<vmem>>, %arg5: memref<1x16xf32, #tpu.memory_space<vmem>>, %arg6: memref<1x1x16x16xf32, #tpu.memory_space<vmem>>) attributes {dimension_semantics = [#tpu.dimension_semantics<parallel>], iteration_bounds = array<i64: 2>, scalar_prefetch = 0 : i64, scratch_operands = 0 : i64, tpu.core_type = #tpu.core_type<tc>, window_params = [{transform_indices = @transform_0, window_bounds = array<i64: 1, 4, 16, 16>}, {pipeline_mode = #tpu.pipeline_mode<synchronous>, transform_indices = @transform_1, window_bounds = array<i64: 16, 16>}, {pipeline_mode = #tpu.pipeline_mode<synchronous>, transform_indices = @transform_2, window_bounds = array<i64: 16, 1>}, {pipeline_mode = #tpu.pipeline_mode<synchronous>, transform_indices = @transform_3, window_bounds = array<i64: 16, 16>}, {pipeline_mode = #tpu.pipeline_mode<synchronous>, transform_indices = @transform_4, window_bounds = array<i64: 1, 16>}, {transform_indices = @transform_5, window_bounds = array<i64: 1, 1, 16, 16>}]} {
    %c0 = arith.constant 0 : index
    %c0_0 = arith.constant 0 : index
    %c0_1 = arith.constant 0 : index
    %c0_2 = arith.constant 0 : index
    %0 = vector.load %arg1[%c0, %c0_0, %c0_1, %c0_2] : memref<1x4x16x16xf32, #tpu.memory_space<vmem>>, vector<1x1x16x16xf32>
    %1 = vector.shape_cast %0 : vector<1x1x16x16xf32> to vector<16x16xf32>
    %c0_3 = arith.constant 0 : index
    %c1 = arith.constant 1 : index
    %c0_4 = arith.constant 0 : index
    %c0_5 = arith.constant 0 : index
    %2 = vector.load %arg1[%c0_3, %c1, %c0_4, %c0_5] : memref<1x4x16x16xf32, #tpu.memory_space<vmem>>, vector<1x1x16x16xf32>
    %3 = vector.shape_cast %2 : vector<1x1x16x16xf32> to vector<16x16xf32>
    %4 = arith.addf %1, %3 : vector<16x16xf32>
    %c0_6 = arith.constant 0 : index
    %c2 = arith.constant 2 : index
    %c0_7 = arith.constant 0 : index
    %c0_8 = arith.constant 0 : index
    %5 = vector.load %arg1[%c0_6, %c2, %c0_7, %c0_8] : memref<1x4x16x16xf32, #tpu.memory_space<vmem>>, vector<1x1x16x16xf32>
    %6 = vector.shape_cast %5 : vector<1x1x16x16xf32> to vector<16x16xf32>
    %7 = arith.addf %4, %6 : vector<16x16xf32>
    %c0_9 = arith.constant 0 : index
    %c3 = arith.constant 3 : index
    %c0_10 = arith.constant 0 : index
    %c0_11 = arith.constant 0 : index
    %8 = vector.load %arg1[%c0_9, %c3, %c0_10, %c0_11] : memref<1x4x16x16xf32, #tpu.memory_space<vmem>>, vector<1x1x16x16xf32>
    %9 = vector.shape_cast %8 : vector<1x1x16x16xf32> to vector<16x16xf32>
    %10 = arith.addf %7, %9 : vector<16x16xf32>
    %cst = arith.constant 2.500000e-01 : f32
    %11 = vector.broadcast %cst : f32 to vector<16x16xf32>
    %12 = arith.mulf %10, %11 : vector<16x16xf32>
    %c0_12 = arith.constant 0 : index
    %c0_13 = arith.constant 0 : index
    %13 = vector.load %arg2[%c0_12, %c0_13] : memref<16x16xf32, #tpu.memory_space<vmem>>, vector<16x16xf32>
    %cst_14 = arith.constant dense<0.000000e+00> : vector<16x16xf32>
    %14 = tpu.matmul %13, %12, %cst_14 {dimension_numbers = #tpu.dot_dimension_numbers<[1], [0], [0], [1], [0, 0, 1, 1], [], []>} : vector<16x16xf32>, vector<16x16xf32>, vector<16x16xf32> -> vector<16x16xf32>
    %c0_15 = arith.constant 0 : index
    %c0_16 = arith.constant 0 : index
    %15 = vector.load %arg3[%c0_15, %c0_16] : memref<16x1xf32, #tpu.memory_space<vmem>>, vector<16x1xf32>
    %16 = vector.broadcast %15 : vector<16x1xf32> to vector<16x16xf32>
    %17 = arith.addf %14, %16 : vector<16x16xf32>
    %18 = arith.negf %17 : vector<16x16xf32>
    %19 = math.exp %18 : vector<16x16xf32>
    %cst_17 = arith.constant 1.000000e+00 : f32
    %20 = vector.broadcast %cst_17 : f32 to vector<16x16xf32>
    %21 = arith.addf %20, %19 : vector<16x16xf32>
    %22 = arith.divf %20, %21 : vector<16x16xf32>
    %c0_18 = arith.constant 0 : index
    %c0_19 = arith.constant 0 : index
    %23 = vector.load %arg4[%c0_18, %c0_19] : memref<16x16xf32, #tpu.memory_space<vmem>>, vector<16x16xf32>
    %cst_20 = arith.constant dense<0.000000e+00> : vector<16x16xf32>
    %24 = tpu.matmul %22, %23, %cst_20 {dimension_numbers = #tpu.dot_dimension_numbers<[1], [0], [0], [1], [0, 0, 1, 1], [], []>} : vector<16x16xf32>, vector<16x16xf32>, vector<16x16xf32> -> vector<16x16xf32>
    %c0_21 = arith.constant 0 : index
    %c0_22 = arith.constant 0 : index
    %25 = vector.load %arg5[%c0_21, %c0_22] : memref<1x16xf32, #tpu.memory_space<vmem>>, vector<1x16xf32>
    %26 = vector.broadcast %25 : vector<1x16xf32> to vector<16x16xf32>
    %27 = arith.addf %24, %26 : vector<16x16xf32>
    %28 = arith.negf %27 : vector<16x16xf32>
    %29 = math.exp %28 : vector<16x16xf32>
    %cst_23 = arith.constant 1.000000e+00 : f32
    %30 = vector.broadcast %cst_23 : f32 to vector<16x16xf32>
    %31 = arith.addf %30, %29 : vector<16x16xf32>
    %32 = arith.divf %30, %31 : vector<16x16xf32>
    %c0_24 = arith.constant 0 : index
    %c0_25 = arith.constant 0 : index
    %c0_26 = arith.constant 0 : index
    %c0_27 = arith.constant 0 : index
    %33 = vector.load %arg6[%c0_24, %c0_25, %c0_26, %c0_27] : memref<1x1x16x16xf32, #tpu.memory_space<vmem>>, vector<1x1x16x16xf32>
    %34 = vector.shape_cast %33 : vector<1x1x16x16xf32> to vector<16x16xf32>
    %35 = vector.shape_cast %32 : vector<16x16xf32> to vector<1x1x16x16xf32>
    tpu.vector_store %arg6[%c0_24, %c0_25, %c0_26, %c0_27], %35 {strides = array<i32>} : memref<1x1x16x16xf32, #tpu.memory_space<vmem>>, vector<1x1x16x16xf32>,
    return
  }
  func.func @transform_0(%arg0: i32) -> (i32, i32, i32, i32) {
    %c0_i32 = arith.constant 0 : i32
    %c0_i32_0 = arith.constant 0 : i32
    %c0_i32_1 = arith.constant 0 : i32
    %c0_i32_2 = arith.constant 0 : i32
    return %arg0, %c0_i32, %c0_i32_0, %c0_i32_1 : i32, i32, i32, i32
  }
  func.func @transform_1(%arg0: i32) -> (i32, i32) {
    %c0_i32 = arith.constant 0 : i32
    %c0_i32_0 = arith.constant 0 : i32
    %c0_i32_1 = arith.constant 0 : i32
    return %c0_i32, %c0_i32_0 : i32, i32
  }
  func.func @transform_2(%arg0: i32) -> (i32, i32) {
    %c0_i32 = arith.constant 0 : i32
    %c0_i32_0 = arith.constant 0 : i32
    %c0_i32_1 = arith.constant 0 : i32
    return %c0_i32, %c0_i32_0 : i32, i32
  }
  func.func @transform_3(%arg0: i32) -> (i32, i32) {
    %c0_i32 = arith.constant 0 : i32
    %c0_i32_0 = arith.constant 0 : i32
    %c0_i32_1 = arith.constant 0 : i32
    return %c0_i32, %c0_i32_0 : i32, i32
  }
  func.func @transform_4(%arg0: i32) -> (i32, i32) {
    %c0_i32 = arith.constant 0 : i32
    %c0_i32_0 = arith.constant 0 : i32
    %c0_i32_1 = arith.constant 0 : i32
    return %c0_i32, %c0_i32_0 : i32, i32
  }
  func.func @transform_5(%arg0: i32) -> (i32, i32, i32, i32) {
    %c0_i32 = arith.constant 0 : i32
    %c0_i32_0 = arith.constant 0 : i32
    %c0_i32_1 = arith.constant 0 : i32
    %c0_i32_2 = arith.constant 0 : i32
    return %arg0, %c0_i32, %c0_i32_0, %c0_i32_1 : i32, i32, i32, i32
  }
}

</mosaic_0001>

<llo_original>
// kernel: tpu_custom_call.1
$region0: #{tpu_custom_call.1}
  #allocation0 [shape = 'u32[]', space=smem, size = 0x4, offset = 0x4, fixed_abs, tag = 'smem constant byte address 0x4 - core index']
  #allocation1 [shape = 'u32[144,128]{1,0:T(1,128)}', space=vmem, size = 0x12000, scoped, tag = 'internal scratch']
  %s0 = inlined_call_operand.hbm [shape: f32[2,4,16,16], index: 0, kind: input, shape index: {}]
  %s1 = inlined_call_operand.vmem [shape: f32[16,16], index: 1, kind: input, shape index: {}]
  %s2 = inlined_call_operand.vmem [shape: f32[16,1], index: 2, kind: input, shape index: {}]
  %s3 = inlined_call_operand.hbm [shape: f32[16,16], index: 3, kind: input, shape index: {}]
  %s4 = inlined_call_operand.vmem [shape: f32[1,16], index: 4, kind: input, shape index: {}]
  %s5 = inlined_call_operand.hbm [shape: f32[2,1,16,16], index: 5, kind: output, shape index: {}]
  %s6 = sld [smem:[#allocation0]]
  $region61: #{tpu_custom_call.1} parent=0
    _
  %s8 = ssub.s32 1, %s6
  %s9 = scalar_select 0, %s8, %s6
  $region1: #{tpu_custom_call.1} parent=0
    #allocation2 [shape = 'u8[65536]{0}', space=vmem, size = 0x10000, scoped, tag = 'input window, operand 0']
    #allocation3 [shape = 's32[2]{0}', space=sflag, size = 0x8, scoped, tag = 'scoped memory for tpu_custom_call.1']
    #allocation4 [shape = 's32[2]{0}', space=sflag, size = 0x8, scoped, tag = 'scoped memory for tpu_custom_call.1']
    #allocation5 [shape = 'u8[8192]{0}', space=vmem, size = 0x2000, scoped, tag = 'input window, operand 3, single buffered']
    #allocation6 [shape = 's32[1]{0}', space=sflag, size = 0x4, scoped, tag = 'scoped memory for tpu_custom_call.1']
    #allocation7 [shape = 'u8[16384]{0}', space=vmem, size = 0x4000, scoped, tag = 'output window, operand 0']
    %10 = vsyncpa [#allocation3], 0
    %s11 = scalar_lea.sflag [#allocation3], 1
    %12 = vsyncpa %s11, 0
    %13 = vsyncpa [#allocation6], 0
    %14 = vsyncpa [#allocation4], 0
    %s15 = scalar_lea.sflag [#allocation4], 1
    %16 = vsyncpa %s15, 0
    loop: start=0, step=1, limit=4
    $region2: #{tpu_custom_call.1} parent=1 // loop_pre_header
      _
    $region3: #{tpu_custom_call.1} parent=1 // loop_header
      %s18 = sphi 0, %s22
      %p19 = scmp.ge.s32.totalorder %s18, 4
      %s28 = sphi 0, %s30
      %s31 = sphi 0, %s28
      %s32 = sphi 0, %s31
      %s48 = sphi 0, %s32
      %s52 = sphi 0, %s52
      %s54 = sphi 0, %s52
      %s55 = sphi 0, %s54
      %s69 = sphi 0, %s55
      %s73 = sphi 0, %s73
      %s75 = sphi 0, %s73
      %s76 = sphi 0, %s75
      %s90 = sphi 0, %s76
      %s94 = sphi 0, %s94
      %s96 = sphi 0, %s94
      %s97 = sphi 0, %s96
      %s111 = sphi 0, %s97
      %s115 = sphi 0, %s115
      %s117 = sphi 0, %s115
      %s118 = sphi 0, %s117
      %s132 = sphi 0, %s118
      %s138 = sphi 0, %s140
      %s141 = sphi 0, %s138
      %s142 = sphi 0, %s141
      %s158 = sphi 0, %s142
    $region4: #{tpu_custom_call.1} parent=1 // loop_header_branch
      %21 = sbr.rel (%p19) target = $region8
    $region5: #{tpu_custom_call.1} parent=1 // loop_body
      %s23 = ssub.s32 %s18, 1
      %s24 = ssub.s32 %s18, 2
      %s25 = sadd.s32 %s18, 1
      %s26 = ssub.s32 %s18, %s25
      %p27 = scmp.eq.s32.totalorder %s26, 0
      %s29 = sadd.s32 %s28, 1
      %s30 = scalar_select %p27, %s28, %s29
      %p33 = pneg %p27
      %p34 = scmp.eq.s32.totalorder %s18, 1
      %p35 = por %p33, %p34
      %p36 = scmp.ne.s32.totalorder %s28, %s31
      %p37 = scmp.eq.s32.totalorder %s18, 0
      %p38 = por %p36, %p37
      %p39 = scmp.ne.s32.totalorder %s28, %s31
      %p40 = scmp.eq.s32.totalorder %s23, 1
      %p41 = por %p39, %p40
      %p42 = scmp.ne.s32.totalorder %s31, %s32
      %p43 = scmp.eq.s32.totalorder %s23, 0
      %p44 = por %p42, %p43
      %p45 = scmp.ne.s32.totalorder %s31, %s32
      %p46 = scmp.eq.s32.totalorder %s24, 1
      %p47 = por %p45, %p46
      %p49 = scmp.ne.s32.totalorder %s32, %s48
      %p50 = scmp.eq.s32.totalorder %s24, 0
      %p51 = por %p49, %p50
      %s53 = sadd.s32 %s52, 1
      %p56 = scmp.eq.s32.totalorder %s18, 1
      %p57 = scmp.ne.s32.totalorder %s52, %s54
      %p58 = scmp.eq.s32.totalorder %s18, 0
      %p59 = por %p57, %p58
      %p60 = scmp.ne.s32.totalorder %s52, %s54
      %p61 = scmp.eq.s32.totalorder %s23, 1
      %p62 = por %p60, %p61
      %p63 = scmp.ne.s32.totalorder %s54, %s55
      %p64 = scmp.eq.s32.totalorder %s23, 0
      %p65 = por %p63, %p64
      %p66 = scmp.ne.s32.totalorder %s54, %s55
      %p67 = scmp.eq.s32.totalorder %s24, 1
      %p68 = por %p66, %p67
      %p70 = scmp.ne.s32.totalorder %s55, %s69
      %p71 = scmp.eq.s32.totalorder %s24, 0
      %p72 = por %p70, %p71
      %s74 = sadd.s32 %s73, 1
      %p77 = scmp.eq.s32.totalorder %s18, 1
      %p78 = scmp.ne.s32.totalorder %s73, %s75
      %p79 = scmp.eq.s32.totalorder %s18, 0
      %p80 = por %p78, %p79
      %p81 = scmp.ne.s32.totalorder %s73, %s75
      %p82 = scmp.eq.s32.totalorder %s23, 1
      %p83 = por %p81, %p82
      %p84 = scmp.ne.s32.totalorder %s75, %s76
      %p85 = scmp.eq.s32.totalorder %s23, 0
      %p86 = por %p84, %p85
      %p87 = scmp.ne.s32.totalorder %s75, %s76
      %p88 = scmp.eq.s32.totalorder %s24, 1
      %p89 = por %p87, %p88
      %p91 = scmp.ne.s32.totalorder %s76, %s90
      %p92 = scmp.eq.s32.totalorder %s24, 0
      %p93 = por %p91, %p92
      %s95 = sadd.s32 %s94, 1
      %p98 = scmp.eq.s32.totalorder %s18, 1
      %p99 = scmp.ne.s32.totalorder %s94, %s96
      %p100 = scmp.eq.s32.totalorder %s18, 0
      %p101 = por %p99, %p100
      %p102 = scmp.ne.s32.totalorder %s94, %s96
      %p103 = scmp.eq.s32.totalorder %s23, 1
      %p104 = por %p102, %p103
      %p105 = scmp.ne.s32.totalorder %s96, %s97
      %p106 = scmp.eq.s32.totalorder %s23, 0
      %p107 = por %p105, %p106
      %p108 = scmp.ne.s32.totalorder %s96, %s97
      %p109 = scmp.eq.s32.totalorder %s24, 1
      %p110 = por %p108, %p109
      %p112 = scmp.ne.s32.totalorder %s97, %s111
      %p113 = scmp.eq.s32.totalorder %s24, 0
      %p114 = por %p112, %p113
      %s116 = sadd.s32 %s115, 1
      %p119 = scmp.eq.s32.totalorder %s18, 1
      %p120 = scmp.ne.s32.totalorder %s115, %s117
      %p121 = scmp.eq.s32.totalorder %s18, 0
      %p122 = por %p120, %p121
      %p123 = scmp.ne.s32.totalorder %s115, %s117
      %p124 = scmp.eq.s32.totalorder %s23, 1
      %p125 = por %p123, %p124
      %p126 = scmp.ne.s32.totalorder %s117, %s118
      %p127 = scmp.eq.s32.totalorder %s23, 0
      %p128 = por %p126, %p127
      %p129 = scmp.ne.s32.totalorder %s117, %s118
      %p130 = scmp.eq.s32.totalorder %s24, 1
      %p131 = por %p129, %p130
      %p133 = scmp.ne.s32.totalorder %s118, %s132
      %p134 = scmp.eq.s32.totalorder %s24, 0
      %p135 = por %p133, %p134
      %s136 = ssub.s32 %s18, %s25
      %p137 = scmp.eq.s32.totalorder %s136, 0
      %s139 = sadd.s32 %s138, 1
      %s140 = scalar_select %p137, %s138, %s139
      %p143 = pneg %p137
      %p144 = scmp.eq.s32.totalorder %s18, 1
      %p145 = por %p143, %p144
      %p146 = scmp.ne.s32.totalorder %s138, %s141
      %p147 = scmp.eq.s32.totalorder %s18, 0
      %p148 = por %p146, %p147
      %p149 = scmp.ne.s32.totalorder %s138, %s141
      %p150 = scmp.eq.s32.totalorder %s23, 1
      %p151 = por %p149, %p150
      %p152 = scmp.ne.s32.totalorder %s141, %s142
      %p153 = scmp.eq.s32.totalorder %s23, 0
      %p154 = por %p152, %p153
      %p155 = scmp.ne.s32.totalorder %s141, %s142
      %p156 = scmp.eq.s32.totalorder %s24, 1
      %p157 = por %p155, %p156
      %p159 = scmp.ne.s32.totalorder %s142, %s158
      %p160 = scmp.eq.s32.totalorder %s24, 0
      %p161 = por %p159, %p160
      %p162 = scmp.le.s32.totalorder 1, %s18
      %p163 = scmp.lt.s32.totalorder %s18, 3
      %p164 = pnand %p162, %p163
      %p165 = pneg %p164
      // Predicated region
      $region9: #{tpu_custom_call.1} parent=5 // pred_check
        _
      $region10: #{tpu_custom_call.1} parent=5 // pred_check_branch
        %167 = sbr.rel (%p164) target = $region12
      $region11: #{tpu_custom_call.1} parent=5 // pred_region
        %s168 = ssub.s32 %s18, 1
        // Predicated region
        $region13: #{tpu_custom_call.1} parent=11 // pred_check
          %p169 = pneg %p65
        $region14: #{tpu_custom_call.1} parent=11 // pred_check_branch
          %171 = sbr.rel (%p169) target = $region16
        $region15: #{tpu_custom_call.1} parent=11 // pred_region
          _
        $region16: #{tpu_custom_call.1} parent=11 // pred_fallthru
          _
        // Predicated region
        $region17: #{tpu_custom_call.1} parent=11 // pred_check
          %p172 = pneg %p86
        $region18: #{tpu_custom_call.1} parent=11 // pred_check_branch
          %174 = sbr.rel (%p172) target = $region20
        $region19: #{tpu_custom_call.1} parent=11 // pred_region
          _
        $region20: #{tpu_custom_call.1} parent=11 // pred_fallthru
          _
        // Predicated region
        $region21: #{tpu_custom_call.1} parent=11 // pred_check
          %p175 = pneg %p107
        $region22: #{tpu_custom_call.1} parent=11 // pred_check_branch
          %177 = sbr.rel (%p175) target = $region24
        $region23: #{tpu_custom_call.1} parent=11 // pred_region
          %s179 = ssub.s32 256, 256
          %180 = vsyncadd [#allocation6], %s179
          %s181 = sshll.u32 [#allocation5], 4
          %s182 = int_to_ptr.vmem [resolvable:$true] %s181
          %187 = dma.hbm_to_vmem [thread:$0]  %s3, 256, %s182, [#allocation6], 128, 128, 8
        $region24: #{tpu_custom_call.1} parent=11 // pred_fallthru
          _
        // Predicated region
        $region25: #{tpu_custom_call.1} parent=11 // pred_check
          %p188 = pneg %p128
        $region26: #{tpu_custom_call.1} parent=11 // pred_check_branch
          %190 = sbr.rel (%p188) target = $region28
        $region27: #{tpu_custom_call.1} parent=11 // pred_region
          _
        $region28: #{tpu_custom_call.1} parent=11 // pred_fallthru
          _
      $region12: #{tpu_custom_call.1} parent=5 // pred_fallthru
        _
      %p191 = scmp.lt.s32.totalorder %s18, 2
      // Predicated region
      $region29: #{tpu_custom_call.1} parent=5 // pred_check
        %p192 = pneg %p191
      $region30: #{tpu_custom_call.1} parent=5 // pred_check_branch
        %194 = sbr.rel (%p192) target = $region32
      $region31: #{tpu_custom_call.1} parent=5 // pred_region
        // Predicated region
        $region33: #{tpu_custom_call.1} parent=31 // pred_check
          %p195 = pneg %p38
        $region34: #{tpu_custom_call.1} parent=31 // pred_check_branch
          %197 = sbr.rel (%p195) target = $region36
        $region35: #{tpu_custom_call.1} parent=31 // pred_region
          %s198 = sand.u32 %s28, 1
          %s199 = scalar_lea.sflag [#allocation3], %s198
          %s200 = sand.u32 %s28, 1
          %s201 = smul.addr %s200, 64
          %s202 = scalar_lea.vmem [#allocation2], %s201
          %s204 = ssub.s32 1024, 1024
          %205 = vsyncadd %s199, %s204
          %s206 = smul.addr %s18, 8
          %s207 = smul.addr %s206, 128
          %s208 = scalar_lea.hbm %s0, %s207
          %s209 = sshll.u32 %s202, 4
          %s210 = int_to_ptr.vmem [resolvable:$true] %s209
          %215 = dma.hbm_to_vmem [thread:$0]  %s208, 1024, %s210, %s199, 128, 128, 8
        $region36: #{tpu_custom_call.1} parent=31 // pred_fallthru
          _
      $region32: #{tpu_custom_call.1} parent=5 // pred_fallthru
        _
      %p216 = scmp.le.s32.totalorder 1, %s18
      %p217 = scmp.lt.s32.totalorder %s18, 3
      %p218 = pnand %p216, %p217
      %p219 = pneg %p218
      // Predicated region
      $region37: #{tpu_custom_call.1} parent=5 // pred_check
        _
      $region38: #{tpu_custom_call.1} parent=5 // pred_check_branch
        %221 = sbr.rel (%p218) target = $region40
      $region39: #{tpu_custom_call.1} parent=5 // pred_region
        %s222 = ssub.s32 %s18, 1
        %s223 = sand.u32 %s31, 1
        %s224 = scalar_lea.sflag [#allocation3], %s223
        %s225 = sand.u32 %s31, 1
        %s226 = smul.addr %s225, 64
        %s227 = scalar_lea.vmem [#allocation2], %s226
        // Predicated region
        $region41: #{tpu_custom_call.1} parent=39 // pred_check
          %p228 = pneg %p44
        $region42: #{tpu_custom_call.1} parent=39 // pred_check_branch
          %230 = sbr.rel (%p228) target = $region44
        $region43: #{tpu_custom_call.1} parent=39 // pred_region
          %231 = dma.done %s224, 1024
        $region44: #{tpu_custom_call.1} parent=39 // pred_fallthru
          _
        // Predicated region
        $region45: #{tpu_custom_call.1} parent=39 // pred_check
          %p232 = pneg %p107
        $region46: #{tpu_custom_call.1} parent=39 // pred_check_branch
          %234 = sbr.rel (%p232) target = $region48
        $region47: #{tpu_custom_call.1} parent=39 // pred_region
          %235 = dma.done [#allocation6], 256
        $region48: #{tpu_custom_call.1} parent=39 // pred_fallthru
          _
        %s236 = sand.u32 %s31, 1
        %s237 = scalar_lea.sflag [#allocation3], %s236
        %s238 = sand.u32 %s31, 1
        %s239 = smul.addr %s238, 64
        %s240 = scalar_lea.vmem [#allocation2], %s239
        %p241 = pneg %p44
        %p242 = pneg %p41
        %p243 = pneg %p65
        %p244 = pneg %p62
        %p245 = pneg %p86
        %p246 = pneg %p83
        %p247 = pneg %p107
        %p248 = pneg %p104
        %p249 = pneg %p128
        %p250 = pneg %p125
        %p251 = pneg %p154
        %p252 = pneg %p151
        %s253 = sand.u32 %s141, 1
        %s254 = scalar_lea.sflag [#allocation4], %s253
        %s255 = sand.u32 %s141, 1
        %s256 = smul.addr %s255, 16
        %s257 = scalar_lea.vmem [#allocation7], %s256
        %v258 = vld [vmem:[%s227] sm:$0xff]
        %v259 = vld [vmem:[%s227 + $0x8] sm:$0xff]
        %s260 = scalar_lea.vmem %s227, 16 [#allocation2]
        %v261 = vld [vmem:[%s260] sm:$0xff]
        %v262 = vld [vmem:[%s260 + $0x8] sm:$0xff]
        %v263 = vadd.f32 %v258, %v261
        %v264 = vadd.f32 %v259, %v262
        %s265 = scalar_lea.vmem %s227, 32 [#allocation2]
        %v266 = vld [vmem:[%s265] sm:$0xff]
        %v267 = vld [vmem:[%s265 + $0x8] sm:$0xff]
        %v268 = vadd.f32 %v263, %v266
        %v269 = vadd.f32 %v264, %v267
        %s270 = scalar_lea.vmem %s227, 48 [#allocation2]
        %v271 = vld [vmem:[%s270] sm:$0xff]
        %v272 = vld [vmem:[%s270 + $0x8] sm:$0xff]
        %v273 = vadd.f32 %v268, %v271
        %v274 = vadd.f32 %v269, %v272
        %v275 = vmul.f32 %v273, 0.25
        %v276 = vmul.f32 %v274, 0.25
        %v277 = vld [vmem:[%s1] sm:$0xff]
        %v278 = vld [vmem:[%s1 + $0x8] sm:$0xff]
        %v279 = vld [vmem:[%s2] sm:$0xff]
        %v280 = vld [vmem:[%s2 + $0x8] sm:$0xff]
        %282 = vset.pattern.permute.xlu0 0
        %283 = vperm.xlu0 %282, %v279
        %v284 = vpop.permute.xlu0 %283
        %287 = vset.pattern.permute.xlu0 0
        %288 = vperm.xlu0 %287, %v280
        %v289 = vpop.permute.xlu0 %288
        %vm291 = vcmask 130048
        %v293 = vsel %vm291, %v277, 0
        %v296 = vsel %vm291, %v278, 0
        %298 = vmatprep.subr.mxu0 0.0
        %299 = vmatpush1.msra.mxu0 %v275
        %300 = vmatprep.subr.mxu0 0.0
        %301 = vmatpush1.msra.mxu0 %v276
        %302 = vmatprep.subr.mxu0 0.0
        %303 = vmatpush1.msra.mxu0 0.0
        %304 = vmatprep.subr.mxu0 0.0
        %305 = vmatpush1.msra.mxu0 0.0
        %306 = vmatprep.subr.mxu0 0.0
        %307 = vmatpush1.msra.mxu0 0.0
        %308 = vmatprep.subr.mxu0 0.0
        %309 = vmatpush1.msra.mxu0 0.0
        %310 = vmatprep.subr.mxu0 0.0
        %311 = vmatpush1.msra.mxu0 0.0
        %312 = vmatprep.subr.mxu0 0.0
        %313 = vmatpush1.msra.mxu0 0.0
        %314 = vmatprep.subr.mxu0 0.0
        %315 = vmatpush1.msra.mxu0 0.0
        %316 = vmatprep.subr.mxu0 0.0
        %317 = vmatpush1.msra.mxu0 0.0
        %318 = vmatprep.subr.mxu0 0.0
        %319 = vmatpush1.msra.mxu0 0.0
        %320 = vmatprep.subr.mxu0 0.0
        %321 = vmatpush1.msra.mxu0 0.0
        %322 = vmatprep.subr.mxu0 0.0
        %323 = vmatpush1.msra.mxu0 0.0
        %324 = vmatprep.subr.mxu0 0.0
        %325 = vmatpush1.msra.mxu0 0.0
        %326 = vmatprep.subr.mxu0 0.0
        %327 = vmatpush1.msra.mxu0 0.0
        %328 = vmatprep.subr.mxu0 0.0
        %329 = vmatpush1.msra.mxu0 0.0
        %330 = vmatprep.subr.mxu0 0.0
        %331 = vmatpush1.msra.mxu0 0.0
        %332 = vmatprep.subr.mxu0 0.0
        %333 = vmatpush1.msra.mxu0 0.0
        %334 = vmatprep.subr.mxu0 0.0
        %335 = vmatpush1.msra.mxu0 0.0
        %336 = vmatprep.subr.mxu0 0.0
        %337 = vmatpush1.msra.mxu0 0.0
        %338 = vmatprep.subr.mxu0 0.0
        %339 = vmatpush1.msra.mxu0 0.0
        %340 = vmatprep.subr.mxu0 0.0
        %341 = vmatpush1.msra.mxu0 0.0
        %342 = vmatprep.subr.mxu0 0.0
        %343 = vmatpush1.msra.mxu0 0.0
        %344 = vmatprep.subr.mxu0 0.0
        %345 = vmatpush1.msra.mxu0 0.0
        %346 = vmatprep.subr.mxu0 0.0
        %347 = vmatpush1.msra.mxu0 0.0
        %348 = vmatprep.subr.mxu0 0.0
        %349 = vmatpush1.msra.mxu0 0.0
        %350 = vmatprep.subr.mxu0 0.0
        %351 = vmatpush1.msra.mxu0 0.0
        %352 = vmatprep.subr.mxu0 0.0
        %353 = vmatpush1.msra.mxu0 0.0
        %354 = vmatprep.subr.mxu0 0.0
        %355 = vmatpush1.msra.mxu0 0.0
        %356 = vmatprep.subr.mxu0 0.0
        %357 = vmatpush1.msra.mxu0 0.0
        %358 = vmatprep.subr.mxu0 0.0
        %359 = vmatpush1.msra.mxu0 0.0
        %360 = vmatprep.subr.mxu0 0.0
        %361 = vmatpush1.msra.mxu0 0.0
        %362 = vmatprep.mubr.f32.mxu0 0.0
        %363 = vmatmul.mubr.f32.gmra.mrb[0].mxu0 %v293
        %v364 = vpop.f32.mrb[0].mxu0
        %v365 = vadd.f32 %v284, %v364
        %v366 = vpop.f32.mrb[0].mxu0
        %367 = vmatprep.mubr.f32.mxu0 0.0
        %368 = vmatmul.mubr.f32.gmra.mrb[0].mxu0 %v296
        %v369 = vpop.f32.mrb[0].mxu0
        %v370 = vadd.f32 %v289, %v369
        %v371 = vpop.f32.mrb[0].mxu0
        %372 = vdwg.mxu0
        %v373 = vxor.u32 %v365, 2147483648
        %v374 = vxor.u32 %v370, 2147483648
        %v375 = vmul.f32 %v373, 1.442695
        %v376 = vpow.pop %v375
        %v377 = vmul.f32 %v374, 1.442695
        %v378 = vpow.pop %v377
        %v379 = vadd.f32 %v376, 1.0
        %v380 = vadd.f32 %v378, 1.0
        %v381 = vrcp.pop %v379
        %v382 = vmul.f32 1.0, %v381
        %v383 = vrcp.pop %v380
        %v384 = vmul.f32 1.0, %v383
        %v385 = vld [vmem:[#allocation5] sm:$0xff]
        %v386 = vld [vmem:[#allocation5 + $0x8] sm:$0xff]
        %v387 = vld [vmem:[%s4] sm:$0x1]
        %v389 = vlaneseq
        %v390 = vshrl.u32 %v389, 7
        %v391 = vsub.s32 0, %v390
        %v392 = vrot.slane %v387, %v391
        %v395 = vsel %vm291, %v382, 0
        %v398 = vsel %vm291, %v384, 0
        %400 = vmatprep.subr.mxu0 0.0
        %401 = vmatpush1.msra.mxu0 %v385
        %402 = vmatprep.subr.mxu0 0.0
        %403 = vmatpush1.msra.mxu0 %v386
        %404 = vmatprep.subr.mxu0 0.0
        %405 = vmatpush1.msra.mxu0 0.0
        %406 = vmatprep.subr.mxu0 0.0
        %407 = vmatpush1.msra.mxu0 0.0
        %408 = vmatprep.subr.mxu0 0.0
        %409 = vmatpush1.msra.mxu0 0.0
        %410 = vmatprep.subr.mxu0 0.0
        %411 = vmatpush1.msra.mxu0 0.0
        %412 = vmatprep.subr.mxu0 0.0
        %413 = vmatpush1.msra.mxu0 0.0
        %414 = vmatprep.subr.mxu0 0.0
        %415 = vmatpush1.msra.mxu0 0.0
        %416 = vmatprep.subr.mxu0 0.0
        %417 = vmatpush1.msra.mxu0 0.0
        %418 = vmatprep.subr.mxu0 0.0
        %419 = vmatpush1.msra.mxu0 0.0
        %420 = vmatprep.subr.mxu0 0.0
        %421 = vmatpush1.msra.mxu0 0.0
        %422 = vmatprep.subr.mxu0 0.0
        %423 = vmatpush1.msra.mxu0 0.0
        %424 = vmatprep.subr.mxu0 0.0
        %425 = vmatpush1.msra.mxu0 0.0
        %426 = vmatprep.subr.mxu0 0.0
        %427 = vmatpush1.msra.mxu0 0.0
        %428 = vmatprep.subr.mxu0 0.0
        %429 = vmatpush1.msra.mxu0 0.0
        %430 = vmatprep.subr.mxu0 0.0
        %431 = vmatpush1.msra.mxu0 0.0
        %432 = vmatprep.subr.mxu0 0.0
        %433 = vmatpush1.msra.mxu0 0.0
        %434 = vmatprep.subr.mxu0 0.0
        %435 = vmatpush1.msra.mxu0 0.0
        %436 = vmatprep.subr.mxu0 0.0
        %437 = vmatpush1.msra.mxu0 0.0
        %438 = vmatprep.subr.mxu0 0.0
        %439 = vmatpush1.msra.mxu0 0.0
        %440 = vmatprep.subr.mxu0 0.0
        %441 = vmatpush1.msra.mxu0 0.0
        %442 = vmatprep.subr.mxu0 0.0
        %443 = vmatpush1.msra.mxu0 0.0
        %444 = vmatprep.subr.mxu0 0.0
        %445 = vmatpush1.msra.mxu0 0.0
        %446 = vmatprep.subr.mxu0 0.0
        %447 = vmatpush1.msra.mxu0 0.0
        %448 = vmatprep.subr.mxu0 0.0
        %449 = vmatpush1.msra.mxu0 0.0
        %450 = vmatprep.subr.mxu0 0.0
        %451 = vmatpush1.msra.mxu0 0.0
        %452 = vmatprep.subr.mxu0 0.0
        %453 = vmatpush1.msra.mxu0 0.0
        %454 = vmatprep.subr.mxu0 0.0
        %455 = vmatpush1.msra.mxu0 0.0
        %456 = vmatprep.subr.mxu0 0.0
        %457 = vmatpush1.msra.mxu0 0.0
        %458 = vmatprep.subr.mxu0 0.0
        %459 = vmatpush1.msra.mxu0 0.0
        %460 = vmatprep.subr.mxu0 0.0
        %461 = vmatpush1.msra.mxu0 0.0
        %462 = vmatprep.subr.mxu0 0.0
        %463 = vmatpush1.msra.mxu0 0.0
        %464 = vmatprep.mubr.f32.mxu0 0.0
        %465 = vmatmul.mubr.f32.gmra.mrb[0].mxu0 %v395
        %v466 = vpop.f32.mrb[0].mxu0
        %v467 = vadd.f32 %v392, %v466
        %v468 = vpop.f32.mrb[0].mxu0
        %469 = vmatprep.mubr.f32.mxu0 0.0
        %470 = vmatmul.mubr.f32.gmra.mrb[0].mxu0 %v398
        %v471 = vpop.f32.mrb[0].mxu0
        %v472 = vadd.f32 %v392, %v471
        %v473 = vpop.f32.mrb[0].mxu0
        %474 = vdwg.mxu0
        %v475 = vxor.u32 %v467, 2147483648
        %v476 = vxor.u32 %v472, 2147483648
        %v477 = vmul.f32 %v475, 1.442695
        %v478 = vpow.pop %v477
        %v479 = vmul.f32 %v476, 1.442695
        %v480 = vpow.pop %v479
        %v481 = vadd.f32 %v478, 1.0
        %v482 = vadd.f32 %v480, 1.0
        %v483 = vrcp.pop %v481
        %v484 = vmul.f32 1.0, %v483
        %v485 = vrcp.pop %v482
        %v486 = vmul.f32 1.0, %v485
        %487 = vst.msk [vmem:[%s257] sm:$0xff] %vm291, %v484
        %488 = vst.msk [vmem:[%s257 + $0x8] sm:$0xff] %vm291, %v486
        %s489 = sand.u32 %s141, 1
        %s490 = scalar_lea.sflag [#allocation4], %s489
        %s491 = sand.u32 %s141, 1
        %s492 = smul.addr %s491, 16
        %s493 = scalar_lea.vmem [#allocation7], %s492
        // Predicated region
        $region49: #{tpu_custom_call.1} parent=39 // pred_check
          %p494 = pneg %p151
        $region50: #{tpu_custom_call.1} parent=39 // pred_check_branch
          %496 = sbr.rel (%p494) target = $region52
        $region51: #{tpu_custom_call.1} parent=39 // pred_region
          %s498 = ssub.s32 256, 256
          %499 = vsyncadd %s490, %s498
          %s500 = smul.addr %s23, 2
          %s501 = smul.addr %s500, 128
          %s502 = scalar_lea.hbm %s5, %s501
          %s503 = sshll.u32 %s493, 4
          %s504 = int_to_ptr.vmem [resolvable:$true] %s503
          %509 = dma.vmem_to_hbm [thread:$0]  %s504, 256, %s502, %s490, 128, 128, 8
        $region52: #{tpu_custom_call.1} parent=39 // pred_fallthru
          _
      $region40: #{tpu_custom_call.1} parent=5 // pred_fallthru
        _
      %p510 = scmp.le.s32.totalorder 2, %s18
      // Predicated region
      $region53: #{tpu_custom_call.1} parent=5 // pred_check
        %p511 = pneg %p510
      $region54: #{tpu_custom_call.1} parent=5 // pred_check_branch
        %513 = sbr.rel (%p511) target = $region56
      $region55: #{tpu_custom_call.1} parent=5 // pred_region
        %s514 = ssub.s32 %s18, 2
        // Predicated region
        $region57: #{tpu_custom_call.1} parent=55 // pred_check
          %p515 = pneg %p157
        $region58: #{tpu_custom_call.1} parent=55 // pred_check_branch
          %517 = sbr.rel (%p515) target = $region60
        $region59: #{tpu_custom_call.1} parent=55 // pred_region
          %s518 = sand.u32 %s142, 1
          %s519 = scalar_lea.sflag [#allocation4], %s518
          %s520 = sand.u32 %s142, 1
          %s521 = smul.addr %s520, 16
          %s522 = scalar_lea.vmem [#allocation7], %s521
          %523 = dma.done %s519, 256
        $region60: #{tpu_custom_call.1} parent=55 // pred_fallthru
          _
      $region56: #{tpu_custom_call.1} parent=5 // pred_fallthru
        _
    $region6: #{tpu_custom_call.1} parent=1 // loop_footer
      %s22 = sadd.s32 1, %s18
    $region7: #{tpu_custom_call.1} parent=1 // loop_footer_branch
      %17 = sbr.rel target = $region3
    $region8: #{tpu_custom_call.1} parent=1 // loop_exit
      _
    %524 = vsyncpa [#allocation3], 1
    %s525 = scalar_lea.sflag [#allocation3], 1
    %526 = vsyncpa %s525, 1
    %527 = vsyncpa [#allocation6], 1
    %528 = vsyncpa [#allocation4], 1
    %s529 = scalar_lea.sflag [#allocation4], 1
    %530 = vsyncpa %s529, 1

</llo_original>
